<compile_context>
chip_gen: v7x
topology: tpu7x:2x2x1
jax: 0.10.0
libtpu: 0.0.40
codegen_flags: <defaults>
</compile_context>

<pallas_src>
import math
import functools

import jax
import jax.numpy as jnp
from jax import lax
from jax.experimental import pallas as pl
from jax.experimental.pallas import tpu as pltpu


def _largest_divisor_leq(n, cap):
    for t in range(min(n, cap), 0, -1):
        if n % t == 0:
            return t
    return n


# ----------------------------- Pallas kernel --------------------------------

def bert_image_output_kernel(hs_ref, it_ref, w_ref, b_ref, lnw_ref, lnb_ref,
                             out_ref, acc_ref, *, eps):
    k = pl.program_id(1)

    @pl.when(k == 0)
    def _():
        acc_ref[...] = jnp.zeros_like(acc_ref)

    # bf16 x bf16 -> f32 accumulation on the MXU (lane-dense: full Dm output).
    acc_ref[...] += jnp.dot(hs_ref[...], w_ref[...],
                            preferred_element_type=jnp.float32)

    @pl.when(k == pl.num_programs(1) - 1)
    def _():
        # dense bias + dropout (identity in eval) + residual, all in f32.
        y = acc_ref[...] + b_ref[...] + it_ref[...].astype(jnp.float32)
        # BertLayerNorm (TF style: eps inside the sqrt), f32.
        u = jnp.mean(y, axis=-1, keepdims=True)
        yc = y - u
        s = jnp.mean(yc * yc, axis=-1, keepdims=True)
        y = yc * lax.rsqrt(s + eps)
        out_ref[...] = (lnw_ref[...] * y + lnb_ref[...]).astype(out_ref.dtype)


# ------------------------------- wrapper -------------------------------------

def bert_image_output_pallas(hidden_states, input_tensor, params, *,
                             eps=1e-12, block_rows=256, max_block_k=512):
    """hidden_states: [..., Dff]; input_tensor: [..., Dm]; returns [..., Dm] f32.

    params:
      w    : [Dff, Dm]  (pre-transposed vs. torch nn.Linear.weight [Dm, Dff])
      b    : [Dm]
      ln_w : [Dm]
      ln_b : [Dm]
    """
    *lead, Dff = hidden_states.shape
    Dm = input_tensor.shape[-1]
    assert tuple(input_tensor.shape[:-1]) == tuple(lead)
    N = math.prod(lead) if lead else 1

    # Flatten leading dims; cast matmul operands to bf16. Residual / LN / bias
    # stay f32 (eps=1e-12 LayerNorm needs f32).
    hs2 = hidden_states.reshape(N, Dff).astype(jnp.bfloat16)
    it2 = input_tensor.reshape(N, Dm).astype(jnp.float32)
    w = params["w"].astype(jnp.bfloat16)
    b = params["b"].reshape(1, Dm).astype(jnp.float32)
    lnw = params["ln_w"].reshape(1, Dm).astype(jnp.float32)
    lnb = params["ln_b"].reshape(1, Dm).astype(jnp.float32)

    # Row tile: 256 rows feeds the MXU well at real sizes; partial last tiles
    # are handled by Pallas' masked writes (padded rows are never written).
    tm = N if N <= block_rows else block_rows
    # Contraction tile must divide Dff exactly (padded-K garbage would corrupt
    # the accumulator). 512-wide K tiles keep the 256-wide v6e/v7x MXU fed.
    tk = _largest_divisor_leq(Dff, max_block_k)

    grid = (pl.cdiv(N, tm), Dff // tk)

    # Scoped-VMEM budget from the actual working set ((8,128)-padded tiles,
    # double-buffered inputs/outputs, accumulator) plus headroom.
    def _pad(r, c, itemsize):
        return (-(-r // 8) * 8) * (-(-c // 128) * 128) * itemsize
    est = (2 * (_pad(tm, tk, 2) + _pad(tk, Dm, 2) + _pad(tm, Dm, 4)
                + 3 * _pad(1, Dm, 4))
           + 2 * _pad(tm, Dm, 4)      # output (double-buffered)
           + _pad(tm, Dm, 4))         # f32 accumulator scratch
    vmem_limit = int(min(max(4 * est, 32 * 1024 * 1024), 48 * 1024 * 1024))

    kernel = functools.partial(bert_image_output_kernel, eps=eps)

    out = pl.pallas_call(
        kernel,
        grid_spec=pltpu.PrefetchScalarGridSpec(
            num_scalar_prefetch=0,
            grid=grid,
            in_specs=[
                pl.BlockSpec((tm, tk), lambda i, k: (i, k)),   # hidden_states
                pl.BlockSpec((tm, Dm), lambda i, k: (i, 0)),   # residual input
                pl.BlockSpec((tk, Dm), lambda i, k: (k, 0)),   # weight, streamed over k
                pl.BlockSpec((1, Dm), lambda i, k: (0, 0)),    # bias
                pl.BlockSpec((1, Dm), lambda i, k: (0, 0)),    # LN weight
                pl.BlockSpec((1, Dm), lambda i, k: (0, 0)),    # LN bias
            ],
            out_specs=pl.BlockSpec((tm, Dm), lambda i, k: (i, 0)),
            scratch_shapes=[pltpu.VMEM((tm, Dm), jnp.float32)],
        ),
        out_shape=jax.ShapeDtypeStruct((N, Dm), jnp.float32),
        compiler_params=pltpu.CompilerParams(
            dimension_semantics=("parallel", "arbitrary"),
            vmem_limit_bytes=vmem_limit),
    )(hs2, it2, w, b, lnw, lnb)

    return out.reshape(*lead, Dm)


# --------------------------- pure-JAX reference -------------------------------

def bert_image_output_ref(hidden_states, input_tensor, params, *,
                          eps=1e-12, matmul_dtype=jnp.float32):
    h = hidden_states.astype(matmul_dtype)
    w = params["w"].astype(matmul_dtype)
    y = jnp.dot(h, w, preferred_element_type=jnp.float32) + params["b"]
    y = y + input_tensor                     # dropout == identity (eval mode)
    u = y.mean(-1, keepdims=True)
    s = ((y - u) ** 2).mean(-1, keepdims=True)
    y = (y - u) / jnp.sqrt(s + eps)
    return params["ln_w"] * y + params["ln_b"]


# ----------------------------------- main -------------------------------------

if __name__ == "__main__":
    # v_intermediate_size=64, v_hidden_size=32, batch=2, seq(regions)=8
    B, S, Dff, Dm = 2, 8, 64, 32

    key = jax.random.PRNGKey(0)
    k1, k2, k3, k4, k5, k6 = jax.random.split(key, 6)
    params = {
        "w": (0.02 * jax.random.normal(k1, (Dff, Dm))).astype(jnp.float32),
        "b": (0.02 * jax.random.normal(k2, (Dm,))).astype(jnp.float32),
        "ln_w": (1.0 + 0.1 * jax.random.normal(k3, (Dm,))).astype(jnp.float32),
        "ln_b": (0.1 * jax.random.normal(k4, (Dm,))).astype(jnp.float32),
    }
    hidden_states = jax.random.normal(k5, (B, S, Dff), dtype=jnp.float32)
    input_tensor = jax.random.normal(k6, (B, S, Dm), dtype=jnp.float32)

    # TODO(synk): training-mode dropout (RNG mask) not implemented; eval-mode identity only.
    out = bert_image_output_pallas(hidden_states, input_tensor, params)
    jax.block_until_ready(out)

    # Reference with identically bf16-rounded matmul operands (f32 accum / LN):
    ref_bf16 = bert_image_output_ref(hidden_states, input_tensor, params,
                                     matmul_dtype=jnp.bfloat16)
    err = float(jnp.max(jnp.abs(out - ref_bf16)))
    assert jnp.allclose(out, ref_bf16, atol=1e-4, rtol=1e-4), err

    # Full-f32 reference: bf16 matmul inputs only add small rounding error.
    ref_f32 = bert_image_output_ref(hidden_states, input_tensor, params,
                                    matmul_dtype=jnp.float32)
    err32 = float(jnp.max(jnp.abs(out - ref_f32)))
    assert jnp.allclose(out, ref_f32, atol=5e-2, rtol=5e-2), err32

    print("KERNEL_OK")
</pallas_src>

<mosaic_0001>
module attributes {stable_mosaic.version = 11 : i64} {
  func.func @bert_image_output_kernel(%arg0: i32, %arg1: i32, %arg2: memref<16x64xbf16, #tpu.memory_space<vmem>>, %arg3: memref<16x32xf32, #tpu.memory_space<vmem>>, %arg4: memref<64x32xbf16, #tpu.memory_space<vmem>>, %arg5: memref<1x32xf32, #tpu.memory_space<vmem>>, %arg6: memref<1x32xf32, #tpu.memory_space<vmem>>, %arg7: memref<1x32xf32, #tpu.memory_space<vmem>>, %arg8: memref<16x32xf32, #tpu.memory_space<vmem>>, %arg9: memref<16x32xf32, #tpu.memory_space<vmem>>) attributes {dimension_semantics = [#tpu.dimension_semantics<parallel>, #tpu.dimension_semantics<arbitrary>], iteration_bounds = array<i64: 1, 1>, scalar_prefetch = 0 : i64, scratch_operands = 1 : i64, tpu.core_type = #tpu.core_type<tc>, window_params = [{transform_indices = @transform_0, window_bounds = array<i64: 16, 64>}, {transform_indices = @transform_1, window_bounds = array<i64: 16, 32>}, {transform_indices = @transform_2, window_bounds = array<i64: 64, 32>}, {pipeline_mode = #tpu.pipeline_mode<synchronous>, transform_indices = @transform_3, window_bounds = array<i64: 1, 32>}, {pipeline_mode = #tpu.pipeline_mode<synchronous>, transform_indices = @transform_4, window_bounds = array<i64: 1, 32>}, {pipeline_mode = #tpu.pipeline_mode<synchronous>, transform_indices = @transform_5, window_bounds = array<i64: 1, 32>}, {transform_indices = @transform_6, window_bounds = array<i64: 16, 32>}]} {
    %c0_i32 = arith.constant 0 : i32
    %0 = arith.cmpi eq, %arg1, %c0_i32 : i32
    %1 = arith.extui %0 : i1 to i32
    %c0_i32_0 = arith.constant 0 : i32
    %2 = arith.cmpi ne, %1, %c0_i32_0 : i32
    scf.if %2 {
      %cst_10 = arith.constant 0.000000e+00 : f32
      %12 = vector.broadcast %cst_10 : f32 to vector<16x32xf32>
      %c0_11 = arith.constant 0 : index
      %c0_12 = arith.constant 0 : index
      %13 = vector.load %arg9[%c0_11, %c0_12] : memref<16x32xf32, #tpu.memory_space<vmem>>, vector<16x32xf32>
      tpu.vector_store %arg9[%c0_11, %c0_12], %12 {strides = array<i32>} : memref<16x32xf32, #tpu.memory_space<vmem>>, vector<16x32xf32>,
    } else {
    }
    %c0 = arith.constant 0 : index
    %c0_1 = arith.constant 0 : index
    %3 = vector.load %arg9[%c0, %c0_1] : memref<16x32xf32, #tpu.memory_space<vmem>>, vector<16x32xf32>
    %c0_2 = arith.constant 0 : index
    %c0_3 = arith.constant 0 : index
    %4 = vector.load %arg2[%c0_2, %c0_3] : memref<16x64xbf16, #tpu.memory_space<vmem>>, vector<16x64xbf16>
    %c0_4 = arith.constant 0 : index
    %c0_5 = arith.constant 0 : index
    %5 = vector.load %arg4[%c0_4, %c0_5] : memref<64x32xbf16, #tpu.memory_space<vmem>>, vector<64x32xbf16>
    %cst = arith.constant dense<0.000000e+00> : vector<16x32xf32>
    %6 = tpu.matmul %4, %5, %cst {dimension_numbers = #tpu.dot_dimension_numbers<[1], [0], [0], [1], [0, 0, 1, 1], [], []>} : vector<16x64xbf16>, vector<64x32xbf16>, vector<16x32xf32> -> vector<16x32xf32>
    %7 = arith.addf %3, %6 : vector<16x32xf32>
    %c0_6 = arith.constant 0 : index
    %c0_7 = arith.constant 0 : index
    %8 = vector.load %arg9[%c0_6, %c0_7] : memref<16x32xf32, #tpu.memory_space<vmem>>, vector<16x32xf32>
    tpu.vector_store %arg9[%c0_6, %c0_7], %7 {strides = array<i32>} : memref<16x32xf32, #tpu.memory_space<vmem>>, vector<16x32xf32>,
    %c0_i32_8 = arith.constant 0 : i32
    %9 = arith.cmpi eq, %arg1, %c0_i32_8 : i32
    %10 = arith.extui %9 : i1 to i32
    %c0_i32_9 = arith.constant 0 : i32
    %11 = arith.cmpi ne, %10, %c0_i32_9 : i32
    scf.if %11 {
      %c0_10 = arith.constant 0 : index
      %c0_11 = arith.constant 0 : index
      %12 = vector.load %arg9[%c0_10, %c0_11] : memref<16x32xf32, #tpu.memory_space<vmem>>, vector<16x32xf32>
      %c0_12 = arith.constant 0 : index
      %c0_13 = arith.constant 0 : index
      %13 = vector.load %arg5[%c0_12, %c0_13] : memref<1x32xf32, #tpu.memory_space<vmem>>, vector<1x32xf32>
      %14 = vector.broadcast %13 : vector<1x32xf32> to vector<16x32xf32>
      %15 = arith.addf %12, %14 : vector<16x32xf32>
      %c0_14 = arith.constant 0 : index
      %c0_15 = arith.constant 0 : index
      %16 = vector.load %arg3[%c0_14, %c0_15] : memref<16x32xf32, #tpu.memory_space<vmem>>, vector<16x32xf32>
      %17 = arith.addf %15, %16 : vector<16x32xf32>
      %cst_16 = arith.constant dense<0.000000e+00> : vector<16xf32>
      %18 = vector.multi_reduction <add>, %17, %cst_16 [1] : vector<16x32xf32> to vector<16xf32>
      %19 = vector.shape_cast %18 : vector<16xf32> to vector<16x1xf32>
      %cst_17 = arith.constant 3.200000e+01 : f32
      %20 = vector.broadcast %cst_17 : f32 to vector<16x1xf32>
      %21 = arith.divf %19, %20 : vector<16x1xf32>
      %22 = vector.broadcast %21 : vector<16x1xf32> to vector<16x32xf32>
      %23 = arith.subf %17, %22 : vector<16x32xf32>
      %24 = arith.mulf %23, %23 : vector<16x32xf32>
      %cst_18 = arith.constant dense<0.000000e+00> : vector<16xf32>
      %25 = vector.multi_reduction <add>, %24, %cst_18 [1] : vector<16x32xf32> to vector<16xf32>
      %26 = vector.shape_cast %25 : vector<16xf32> to vector<16x1xf32>
      %cst_19 = arith.constant 3.200000e+01 : f32
      %27 = vector.broadcast %cst_19 : f32 to vector<16x1xf32>
      %28 = arith.divf %26, %27 : vector<16x1xf32>
      %cst_20 = arith.constant 9.99999996E-13 : f32
      %29 = vector.broadcast %cst_20 : f32 to vector<16x1xf32>
      %30 = arith.addf %28, %29 : vector<16x1xf32>
      %31 = math.rsqrt %30 : vector<16x1xf32>
      %32 = vector.broadcast %31 : vector<16x1xf32> to vector<16x32xf32>
      %33 = arith.mulf %23, %32 : vector<16x32xf32>
      %c0_21 = arith.constant 0 : index
      %c0_22 = arith.constant 0 : index
      %34 = vector.load %arg6[%c0_21, %c0_22] : memref<1x32xf32, #tpu.memory_space<vmem>>, vector<1x32xf32>
      %35 = vector.broadcast %34 : vector<1x32xf32> to vector<16x32xf32>
      %36 = arith.mulf %35, %33 : vector<16x32xf32>
      %c0_23 = arith.constant 0 : index
      %c0_24 = arith.constant 0 : index
      %37 = vector.load %arg7[%c0_23, %c0_24] : memref<1x32xf32, #tpu.memory_space<vmem>>, vector<1x32xf32>
      %38 = vector.broadcast %37 : vector<1x32xf32> to vector<16x32xf32>
      %39 = arith.addf %36, %38 : vector<16x32xf32>
      %c0_25 = arith.constant 0 : index
      %c0_26 = arith.constant 0 : index
      %40 = vector.load %arg8[%c0_25, %c0_26] : memref<16x32xf32, #tpu.memory_space<vmem>>, vector<16x32xf32>
      tpu.vector_store %arg8[%c0_25, %c0_26], %39 {strides = array<i32>} : memref<16x32xf32, #tpu.memory_space<vmem>>, vector<16x32xf32>,
    } else {
    }
    return
  }
  func.func @transform_0(%arg0: i32, %arg1: i32) -> (i32, i32) {
    %c0_i32 = arith.constant 0 : i32
    return %arg0, %arg1 : i32, i32
  }
  func.func @transform_1(%arg0: i32, %arg1: i32) -> (i32, i32) {
    %c0_i32 = arith.constant 0 : i32
    %c0_i32_0 = arith.constant 0 : i32
    return %arg0, %c0_i32 : i32, i32
  }
  func.func @transform_2(%arg0: i32, %arg1: i32) -> (i32, i32) {
    %c0_i32 = arith.constant 0 : i32
    %c0_i32_0 = arith.constant 0 : i32
    return %arg1, %c0_i32 : i32, i32
  }
  func.func @transform_3(%arg0: i32, %arg1: i32) -> (i32, i32) {
    %c0_i32 = arith.constant 0 : i32
    %c0_i32_0 = arith.constant 0 : i32
    %c0_i32_1 = arith.constant 0 : i32
    return %c0_i32, %c0_i32_0 : i32, i32
  }
  func.func @transform_4(%arg0: i32, %arg1: i32) -> (i32, i32) {
    %c0_i32 = arith.constant 0 : i32
    %c0_i32_0 = arith.constant 0 : i32
    %c0_i32_1 = arith.constant 0 : i32
    return %c0_i32, %c0_i32_0 : i32, i32
  }
  func.func @transform_5(%arg0: i32, %arg1: i32) -> (i32, i32) {
    %c0_i32 = arith.constant 0 : i32
    %c0_i32_0 = arith.constant 0 : i32
    %c0_i32_1 = arith.constant 0 : i32
    return %c0_i32, %c0_i32_0 : i32, i32
  }
  func.func @transform_6(%arg0: i32, %arg1: i32) -> (i32, i32) {
    %c0_i32 = arith.constant 0 : i32
    %c0_i32_0 = arith.constant 0 : i32
    return %arg0, %c0_i32 : i32, i32
  }
}

</mosaic_0001>

<llo_original>
// kernel: tpu_custom_call.1
$region0: #{tpu_custom_call.1}
  #allocation0 [shape = 'u32[]', space=smem, size = 0x4, offset = 0x4, fixed_abs, tag = 'smem constant byte address 0x4 - core index']
  #allocation1 [shape = 'u32[144,128]{1,0:T(1,128)}', space=vmem, size = 0x12000, scoped, tag = 'internal scratch']
  #allocation2 [shape = 'f32[16,32]{1,0:T(8,128)}', space=vmem, size = 0x2000, scoped, tag = 'scratch operand']
  %s0 = inlined_call_operand.vmem [shape: bf16[16,64], index: 0, kind: input, shape index: {}]
  %s1 = inlined_call_operand.vmem [shape: f32[16,32], index: 1, kind: input, shape index: {}]
  %s2 = inlined_call_operand.vmem [shape: bf16[64,32], index: 2, kind: input, shape index: {}]
  %s3 = inlined_call_operand.vmem [shape: f32[1,32], index: 3, kind: input, shape index: {}]
  %s4 = inlined_call_operand.vmem [shape: f32[1,32], index: 4, kind: input, shape index: {}]
  %s5 = inlined_call_operand.vmem [shape: f32[1,32], index: 5, kind: input, shape index: {}]
  %s6 = inlined_call_operand.hbm [shape: f32[16,32], index: 6, kind: output, shape index: {}]
  %s7 = sld [smem:[#allocation0]]
  $region42: #{tpu_custom_call.1} parent=0
    _
  %s9 = ssub.s32 1, %s7
  %s10 = scalar_select 0, %s9, %s7
  $region1: #{tpu_custom_call.1} parent=0
    #allocation3 [shape = 'u8[8192]{0}', space=vmem, size = 0x2000, scoped, tag = 'output window, operand 0, single buffered']
    #allocation4 [shape = 's32[1]{0}', space=sflag, size = 0x4, scoped, tag = 'scoped memory for tpu_custom_call.1']
    %11 = vsyncpa [#allocation4], 0
    // Predicated region
    $region2: #{tpu_custom_call.1} parent=1 // pred_check
      _
    $region3: #{tpu_custom_call.1} parent=1 // pred_check_branch
      %13 = sbr.rel (0) target = $region5
    $region4: #{tpu_custom_call.1} parent=1 // pred_region
      _
    $region5: #{tpu_custom_call.1} parent=1 // pred_fallthru
      _
    // Predicated region
    $region6: #{tpu_custom_call.1} parent=1 // pred_check
      _
    $region7: #{tpu_custom_call.1} parent=1 // pred_check_branch
      %15 = sbr.rel (0) target = $region9
    $region8: #{tpu_custom_call.1} parent=1 // pred_region
      _
    $region9: #{tpu_custom_call.1} parent=1 // pred_fallthru
      _
    // Predicated region
    $region10: #{tpu_custom_call.1} parent=1 // pred_check
      _
    $region11: #{tpu_custom_call.1} parent=1 // pred_check_branch
      %17 = sbr.rel (0) target = $region13
    $region12: #{tpu_custom_call.1} parent=1 // pred_region
      _
    $region13: #{tpu_custom_call.1} parent=1 // pred_fallthru
      _
    // Predicated region
    $region14: #{tpu_custom_call.1} parent=1 // pred_check
      _
    $region15: #{tpu_custom_call.1} parent=1 // pred_check_branch
      %19 = sbr.rel (0) target = $region17
    $region16: #{tpu_custom_call.1} parent=1 // pred_region
      _
    $region17: #{tpu_custom_call.1} parent=1 // pred_fallthru
      _
    // Predicated region
    $region18: #{tpu_custom_call.1} parent=1 // pred_check
      _
    $region19: #{tpu_custom_call.1} parent=1 // pred_check_branch
      %21 = sbr.rel (0) target = $region21
    $region20: #{tpu_custom_call.1} parent=1 // pred_region
      _
    $region21: #{tpu_custom_call.1} parent=1 // pred_fallthru
      _
    // Predicated region
    $region22: #{tpu_custom_call.1} parent=1 // pred_check
      _
    $region23: #{tpu_custom_call.1} parent=1 // pred_check_branch
      %23 = sbr.rel (0) target = $region25
    $region24: #{tpu_custom_call.1} parent=1 // pred_region
      _
    $region25: #{tpu_custom_call.1} parent=1 // pred_fallthru
      _
    %p25 = scmp.eq.s32.totalorder 0, 0
    // Predicated region
    $region26: #{tpu_custom_call.1} parent=1 // pred_check
      %p26 = pneg %p25
    $region27: #{tpu_custom_call.1} parent=1 // pred_check_branch
      %28 = sbr.rel (%p26) target = $region29
    $region28: #{tpu_custom_call.1} parent=1 // pred_region
      %vm29 = vcmask 261120
      %30 = vst.msk [vmem:[#allocation2] sm:$0xff] %vm29, 0.0
      %31 = vst.msk [vmem:[#allocation2 + $0x8] sm:$0xff] %vm29, 0.0
    $region29: #{tpu_custom_call.1} parent=1 // pred_fallthru
      _
    %v32 = vld [vmem:[#allocation2] sm:$0xff]
    %v33 = vld [vmem:[#allocation2 + $0x8] sm:$0xff]
    %v34 = vld [vmem:[%s0] sm:$0xf]
    %v35 = vld [vmem:[%s0 + $0x4] sm:$0xf]
    %v36 = vld [vmem:[%s2] sm:$0xf]
    %v37 = vld [vmem:[%s2 + $0x4] sm:$0xf]
    %v38 = vld [vmem:[%s2 + $0x8] sm:$0xf]
    %v39 = vld [vmem:[%s2 + $0xc] sm:$0xf]
    %v40 = vld [vmem:[%s2 + $0x10] sm:$0xf]
    %v41 = vld [vmem:[%s2 + $0x14] sm:$0xf]
    %v42 = vld [vmem:[%s2 + $0x18] sm:$0xf]
    %v43 = vld [vmem:[%s2 + $0x1c] sm:$0xf]
    %v46 = vunpack.c.l.b16 %v34
    %v47 = vunpack.c.l.b16 %v35
    %v48 = vpack.c.b16 %v47, %v46
    %v57 = vunpack.c.l.b16 %v36
    %v58 = vunpack.c.l.b16 %v37
    %v59 = vunpack.c.l.b16 %v38
    %v60 = vunpack.c.l.b16 %v39
    %v61 = vunpack.c.l.b16 %v40
    %v62 = vunpack.c.l.b16 %v41
    %v63 = vunpack.c.l.b16 %v42
    %v64 = vunpack.c.l.b16 %v43
    %v65 = vpack.c.b16 %v58, %v57
    %v66 = vpack.c.b16 %v60, %v59
    %v67 = vpack.c.b16 %v62, %v61
    %v68 = vpack.c.b16 %v64, %v63
    %vm73 = vcmask 523264
    %v75 = vsel %vm73, %v48, 0
    %77 = vmatprep.subr.bf16.mxu0 0
    %78 = vmatpush1.bf16.msra.mxu0 %v65
    %79 = vmatprep.subr.bf16.mxu0 0
    %80 = vmatpush1.bf16.msra.mxu0 %v66
    %81 = vmatprep.subr.bf16.mxu0 0
    %82 = vmatpush1.bf16.msra.mxu0 %v67
    %83 = vmatprep.subr.bf16.mxu0 0
    %84 = vmatpush1.bf16.msra.mxu0 %v68
    %85 = vmatprep.subr.bf16.mxu0 0
    %86 = vmatpush1.bf16.msra.mxu0 0
    %87 = vmatprep.subr.bf16.mxu0 0
    %88 = vmatpush1.bf16.msra.mxu0 0
    %89 = vmatprep.subr.bf16.mxu0 0
    %90 = vmatpush1.bf16.msra.mxu0 0
    %91 = vmatprep.subr.bf16.mxu0 0
    %92 = vmatpush1.bf16.msra.mxu0 0
    %93 = vmatprep.subr.bf16.mxu0 0
    %94 = vmatpush1.bf16.msra.mxu0 0
    %95 = vmatprep.subr.bf16.mxu0 0
    %96 = vmatpush1.bf16.msra.mxu0 0
    %97 = vmatprep.subr.bf16.mxu0 0
    %98 = vmatpush1.bf16.msra.mxu0 0
    %99 = vmatprep.subr.bf16.mxu0 0
    %100 = vmatpush1.bf16.msra.mxu0 0
    %101 = vmatprep.subr.bf16.mxu0 0
    %102 = vmatpush1.bf16.msra.mxu0 0
    %103 = vmatprep.subr.bf16.mxu0 0
    %104 = vmatpush1.bf16.msra.mxu0 0
    %105 = vmatprep.subr.bf16.mxu0 0
    %106 = vmatpush1.bf16.msra.mxu0 0
    %107 = vmatprep.subr.bf16.mxu0 0
    %108 = vmatpush1.bf16.msra.mxu0 0
    %109 = vmatprep.mubr.bf16.mxu0 0
    %110 = vmatmul.mubr.bf16.gmra.mrb[0].mxu0 %v75
    %v111 = vpop.f32.mrb[0].mxu0
    %v112 = vadd.f32 0.0, %v111
    %v113 = vpop.f32.mrb[0].mxu0
    %v114 = vpop.f32.mrb[0].mxu0
    %v115 = vadd.f32 0.0, %v114
    %v116 = vpop.f32.mrb[0].mxu0
    %117 = vdwg.mxu0
    %v118 = vadd.f32 %v32, %v112
    %v119 = vadd.f32 %v33, %v115
    %vm120 = vcmask 261120
    %121 = vst.msk [vmem:[#allocation2] sm:$0xff] %vm120, %v118
    %122 = vst.msk [vmem:[#allocation2 + $0x8] sm:$0xff] %vm120, %v119
    // Predicated region
    $region30: #{tpu_custom_call.1} parent=1 // pred_check
      %p123 = pneg %p25
    $region31: #{tpu_custom_call.1} parent=1 // pred_check_branch
      %125 = sbr.rel (%p123) target = $region33
    $region32: #{tpu_custom_call.1} parent=1 // pred_region
      %v126 = vld [vmem:[#allocation2] sm:$0xff]
      %v127 = vld [vmem:[#allocation2 + $0x8] sm:$0xff]
      %v128 = vld [vmem:[%s3] sm:$0x1]
      %v130 = vlaneseq
      %v131 = vshrl.u32 %v130, 7
      %v132 = vsub.s32 0, %v131
      %v133 = vrot.slane %v128, %v132
      %v135 = vadd.f32 %v126, %v133
      %v136 = vadd.f32 %v127, %v133
      %v137 = vld [vmem:[%s1] sm:$0xff]
      %v138 = vld [vmem:[%s1 + $0x8] sm:$0xff]
      %v139 = vadd.f32 %v135, %v137
      %v140 = vadd.f32 %v136, %v138
      %v141 = vsel %vm120, %v139, 0.0
      %142 = vadd.xlane.f32.xlu0 %v141
      %v143 = vpop.xlane.xlu0 %142
      %v144 = vsel %vm120, %v140, 0.0
      %145 = vadd.xlane.f32.xlu0 %v144
      %v146 = vpop.xlane.xlu0 %145
      %v147 = vrcp.pop 32.0
      %v148 = vmul.f32 %v143, %v147
      %v149 = vmul.f32 %v146, %v147
      %v150 = vsub.f32 %v139, %v148
      %v151 = vsub.f32 %v140, %v149
      %v152 = vmul.f32 %v150, %v150
      %v153 = vmul.f32 %v151, %v151
      %v154 = vsel %vm120, %v152, 0.0
      %155 = vadd.xlane.f32.xlu0 %v154
      %v156 = vpop.xlane.xlu0 %155
      %v157 = vsel %vm120, %v153, 0.0
      %158 = vadd.xlane.f32.xlu0 %v157
      %v159 = vpop.xlane.xlu0 %158
      %v160 = vmul.f32 %v156, %v147
      %v161 = vmul.f32 %v159, %v147
      %v162 = vadd.f32 %v160, 1e-12
      %v163 = vadd.f32 %v161, 1e-12
      %v164 = vrsqrt.pop %v162
      %v165 = vrsqrt.pop %v163
      %v166 = vmul.f32 %v150, %v164
      %v167 = vmul.f32 %v151, %v165
      %v168 = vld [vmem:[%s4] sm:$0x1]
      %v170 = vlaneseq
      %v171 = vshrl.u32 %v170, 7
      %v172 = vsub.s32 0, %v171
      %v173 = vrot.slane %v168, %v172
      %v175 = vmul.f32 %v173, %v166
      %v176 = vmul.f32 %v173, %v167
      %v177 = vld [vmem:[%s5] sm:$0x1]
      %v179 = vlaneseq
      %v180 = vshrl.u32 %v179, 7
      %v181 = vsub.s32 0, %v180
      %v182 = vrot.slane %v177, %v181
      %v184 = vadd.f32 %v175, %v182
      %v185 = vadd.f32 %v176, %v182
      %186 = vst.msk [vmem:[#allocation3] sm:$0xff] %vm120, %v184
      %187 = vst.msk [vmem:[#allocation3 + $0x8] sm:$0xff] %vm120, %v185
    $region33: #{tpu_custom_call.1} parent=1 // pred_fallthru
      _
    // Predicated region
    $region34: #{tpu_custom_call.1} parent=1 // pred_check
      _
    $region35: #{tpu_custom_call.1} parent=1 // pred_check_branch
      %189 = sbr.rel (0) target = $region37
    $region36: #{tpu_custom_call.1} parent=1 // pred_region
      %s191 = ssub.s32 256, 256
      %192 = vsyncadd [#allocation4], %s191
      %s193 = sshll.u32 [#allocation3], 4
      %s194 = int_to_ptr.vmem [resolvable:$true] %s193
      %199 = dma.vmem_to_hbm [thread:$0]  %s194, 256, %s6, [#allocation4], 128, 128, 8
    $region37: #{tpu_custom_call.1} parent=1 // pred_fallthru
      _
    // Predicated region
    $region38: #{tpu_custom_call.1} parent=1 // pred_check
      _
    $region39: #{tpu_custom_call.1} parent=1 // pred_check_branch
      %201 = sbr.rel (0) target = $region41
    $region40: #{tpu_custom_call.1} parent=1 // pred_region
      %202 = dma.done [#allocation4], 256
    $region41: #{tpu_custom_call.1} parent=1 // pred_fallthru
      _
    %203 = vsyncpa [#allocation4], 1

</llo_original>
